<compile_context>
chip_gen: v7x
topology: tpu7x:2x2x1
jax: 0.10.0
libtpu: 0.0.40
codegen_flags: <defaults>
</compile_context>

<pallas_src>
import functools

import jax
import jax.numpy as jnp
from jax import lax
from jax.experimental import pallas as pl
from jax.experimental.pallas import tpu as pltpu


def _round_up(x: int, m: int) -> int:
    return (x + m - 1) // m * m


def _largest_divisor_leq(n: int, cap: int) -> int:
    cap = max(1, min(n, cap))
    for d in range(cap, 0, -1):
        if n % d == 0:
            return d
    return 1


def _choose_tile(dim: int, align: int, cap: int):
    """Pick a tile (multiple of `align`, <= cap) that minimizes padding of `dim`.

    Returns (tile, padded_dim)."""
    aligned = _round_up(max(dim, 1), align)
    if aligned <= cap:
        return aligned, aligned            # single block, minimal padding
    best_t, best_p = None, None
    t = (cap // align) * align
    while t >= align:
        padded = _round_up(aligned, t)
        if best_p is None or padded < best_p or (padded == best_p and t > best_t):
            best_t, best_p = t, padded
        if padded == aligned:              # zero waste with the largest tile so far
            break
        t -= align
    return best_t, best_p


# --------------------------------------------------------------------------
# Kernels
# --------------------------------------------------------------------------
def _ensemble_fc_kernel_nok(x_ref, w_ref, b_ref, o_ref, *, compute_dtype):
    # Single-shot contraction: x (Eb, tm, K), w (Eb, K, tn), b (Eb, 1, tn).
    x = x_ref[...].astype(compute_dtype)
    w = w_ref[...].astype(compute_dtype)
    acc = lax.dot_general(
        x, w,
        dimension_numbers=(((2,), (1,)), ((0,), (0,))),
        preferred_element_type=jnp.float32,
    )
    o_ref[...] = (acc + b_ref[...]).astype(o_ref.dtype)


def _ensemble_fc_kernel_k(x_ref, w_ref, b_ref, o_ref, acc_ref, *, compute_dtype):
    # x (Eb, tm, tk), w (Eb, tk, tn), b (Eb, 1, tn), acc VMEM f32 (Eb, tm, tn).
    k = pl.program_id(3)

    @pl.when(k == 0)
    def _():
        acc_ref[...] = jnp.zeros_like(acc_ref)

    x = x_ref[...].astype(compute_dtype)
    w = w_ref[...].astype(compute_dtype)
    acc_ref[...] += lax.dot_general(
        x, w,
        dimension_numbers=(((2,), (1,)), ((0,), (0,))),
        preferred_element_type=jnp.float32,
    )

    @pl.when(k == pl.num_programs(3) - 1)
    def _():
        o_ref[...] = (acc_ref[...] + b_ref[...]).astype(o_ref.dtype)


# --------------------------------------------------------------------------
# Wrapper
# --------------------------------------------------------------------------
def ensemble_fc(x, weight, bias=None, *, compute_dtype=jnp.bfloat16,
                tm=None, tk=None, tn=None, eb=None):
    """y[e] = x[e] @ weight[e] + bias[e] for every ensemble member e."""
    E, B, IN = x.shape
    E_w, IN_w, OUT = weight.shape
    assert E == E_w and IN == IN_w, "shape mismatch between x and weight"
    if bias is None:
        bias = jnp.zeros((E, OUT), x.dtype)
    assert bias.shape == (E, OUT)
    out_dtype = x.dtype

    # ---- tile selection: pad only to (8,128) alignment, then tile ---------
    IN128 = _round_up(IN, 128)

    if tm is None:
        tm, Bp = _choose_tile(B, 8, 512)
    else:
        tm = _round_up(tm, 8)
        Bp = _round_up(_round_up(B, 8), tm)
    if tn is None:
        tn, OUTp = _choose_tile(OUT, 128, 512)
    else:
        tn = _round_up(tn, 128)
        OUTp = _round_up(_round_up(OUT, 128), tn)

    if tk is not None:
        tk = _round_up(tk, 128)
        INp = _round_up(IN128, tk)
    elif IN128 <= 2048:
        tk, INp = IN128, IN128             # whole contraction in one tile
    else:
        tk, INp = _choose_tile(IN, 128, 1024)
    use_k_grid = INp > tk

    # ---- operand prep (avoid an extra HBM round trip when unpadded) -------
    def _prep(a, pads):
        if any(hi for _, hi in pads):
            # pad + cast emitted as one fused XLA op; kernel re-cast is a no-op.
            return jnp.pad(a, pads).astype(compute_dtype)
        return a                            # raw dtype; cast in-kernel (VPU slack)

    xp = _prep(x, ((0, 0), (0, Bp - B), (0, INp - IN)))
    wp = _prep(weight, ((0, 0), (0, INp - IN), (0, OUTp - OUT)))
    bp = jnp.pad(bias, ((0, 0), (0, OUTp - OUT))).astype(jnp.float32).reshape(E, 1, OUTp)

    # ---- VMEM budgeting (per generation) -----------------------------------
    try:
        vmem_cap = int(pltpu.get_tpu_info().vmem_capacity_bytes)
    except Exception:
        vmem_cap = 64 * 1024 * 1024        # conservative (v7x-sized) fallback
    limit_cap = max(32 * 1024 * 1024, min(int(vmem_cap * 0.75), 96 * 1024 * 1024))
    eb_budget = 16 * 1024 * 1024 if vmem_cap > 64 * 1024 * 1024 else 8 * 1024 * 1024

    x_isz = jnp.dtype(xp.dtype).itemsize
    w_isz = jnp.dtype(wp.dtype).itemsize
    o_isz = jnp.dtype(out_dtype).itemsize
    per_member = (2 * tm * tk * x_isz      # x block, double-buffered
                  + 2 * tk * tn * w_isz    # w block, double-buffered
                  + 2 * tn * 4             # bias block (f32)
                  + 2 * tm * tn * o_isz)   # output block, double-buffered
    if use_k_grid:
        per_member += tm * tn * 4          # f32 accumulator scratch

    # ---- ensemble blocking --------------------------------------------------
    if eb is None:
        eb = _largest_divisor_leq(E, max(1, eb_budget // max(per_member, 1)))
    else:
        eb = _largest_divisor_leq(E, eb)
    m_grid = Bp // tm
    n_grid = OUTp // tn
    # v7x has 2 TensorCores: keep at least one "parallel" grid axis >= 2.
    if E >= 2 and E // eb == 1 and m_grid == 1 and n_grid == 1:
        eb = _largest_divisor_leq(E, E // 2)
    e_grid = E // eb

    est = eb * per_member
    vmem_limit = int(min(limit_cap,
                         max(32 * 1024 * 1024, int(est * 1.25) + 2 * 1024 * 1024)))

    out_shape = jax.ShapeDtypeStruct((E, Bp, OUTp), out_dtype)

    if not use_k_grid:
        # Grid (E, N, M) with M innermost -> weight/bias tiles stay resident
        # across the whole M sweep; no accumulator, no revisits.
        kernel = functools.partial(_ensemble_fc_kernel_nok, compute_dtype=compute_dtype)
        yp = pl.pallas_call(
            kernel,
            out_shape=out_shape,
            grid_spec=pltpu.PrefetchScalarGridSpec(
                num_scalar_prefetch=0,
                grid=(e_grid, n_grid, m_grid),
                in_specs=[
                    pl.BlockSpec((eb, tm, tk), lambda e, n, m: (e, m, 0)),
                    pl.BlockSpec((eb, tk, tn), lambda e, n, m: (e, 0, n)),  # resident over M
                    pl.BlockSpec((eb, 1, tn), lambda e, n, m: (e, 0, n)),   # resident over M
                ],
                out_specs=pl.BlockSpec((eb, tm, tn), lambda e, n, m: (e, m, n)),
            ),
            compiler_params=pltpu.CompilerParams(
                dimension_semantics=("parallel", "parallel", "parallel"),
                vmem_limit_bytes=vmem_limit,
            ),
        )(xp, wp, bp)
    else:
        # Large-IN path: K innermost ("arbitrary") with an f32 VMEM accumulator.
        kernel = functools.partial(_ensemble_fc_kernel_k, compute_dtype=compute_dtype)
        yp = pl.pallas_call(
            kernel,
            out_shape=out_shape,
            grid_spec=pltpu.PrefetchScalarGridSpec(
                num_scalar_prefetch=0,
                grid=(e_grid, m_grid, n_grid, INp // tk),
                in_specs=[
                    pl.BlockSpec((eb, tm, tk), lambda e, m, n, k: (e, m, k)),
                    pl.BlockSpec((eb, tk, tn), lambda e, m, n, k: (e, k, n)),
                    pl.BlockSpec((eb, 1, tn), lambda e, m, n, k: (e, 0, n)),
                ],
                out_specs=pl.BlockSpec((eb, tm, tn), lambda e, m, n, k: (e, m, n)),
                scratch_shapes=[pltpu.VMEM((eb, tm, tn), jnp.float32)],
            ),
            compiler_params=pltpu.CompilerParams(
                dimension_semantics=("parallel", "parallel", "parallel", "arbitrary"),
                vmem_limit_bytes=vmem_limit,
            ),
        )(xp, wp, bp)

    return yp[:, :B, :OUT]


def ensemble_fc_reference(x, weight, bias, compute_dtype=jnp.bfloat16):
    # Matches the kernel's numerics: bf16-rounded operands, f32 accumulation.
    x_c = x.astype(compute_dtype).astype(jnp.float32)
    w_c = weight.astype(compute_dtype).astype(jnp.float32)
    return jnp.einsum("ebi,eio->ebo", x_c, w_c) + bias[:, None, :]


if __name__ == "__main__":
    key = jax.random.PRNGKey(0)

    def run_case(ensemble_size, batch, in_features, out_features, key, **kw):
        kx, kw_, kb = jax.random.split(key, 3)
        x = jax.random.normal(kx, (ensemble_size, batch, in_features), jnp.float32)
        weight = jax.random.normal(
            kw_, (ensemble_size, in_features, out_features), jnp.float32
        ) * (1.0 / jnp.sqrt(in_features))
        bias = jax.random.normal(kb, (ensemble_size, out_features), jnp.float32) * 0.1

        y = jax.block_until_ready(ensemble_fc(x, weight, bias, **kw))
        y_ref = ensemble_fc_reference(x, weight, bias)

        assert y.shape == (ensemble_size, batch, out_features)
        assert jnp.allclose(y, y_ref, atol=1e-2, rtol=1e-2), "mismatch vs reference"

    k1, k2, k3 = jax.random.split(key, 3)
    # Tiny FC consistent with the module: ensemble=4, batch=8, in=32, out=32
    # (exercises ensemble blocking + the no-K / padded path).
    run_case(4, 8, 32, 32, k1)
    # Non-aligned shapes exercise the padding / slicing path.
    run_case(4, 10, 33, 40, k2)
    # Aligned shapes + forced small tk exercise the unpadded fast path
    # (in-kernel cast) and the K-grid accumulator path.
    run_case(2, 16, 256, 128, k3, tk=128)

    print("KERNEL_OK")
</pallas_src>

<mosaic_0001>
module attributes {stable_mosaic.version = 11 : i64} {
  func.func @_ensemble_fc_kernel_nok(%arg0: i32, %arg1: i32, %arg2: i32, %arg3: memref<2x8x128xbf16, #tpu.memory_space<vmem>>, %arg4: memref<2x128x128xbf16, #tpu.memory_space<vmem>>, %arg5: memref<2x1x128xf32, #tpu.memory_space<vmem>>, %arg6: memref<2x8x128xf32, #tpu.memory_space<vmem>>) attributes {dimension_semantics = [#tpu.dimension_semantics<parallel>, #tpu.dimension_semantics<parallel>, #tpu.dimension_semantics<parallel>], iteration_bounds = array<i64: 2, 1, 1>, scalar_prefetch = 0 : i64, scratch_operands = 0 : i64, tpu.core_type = #tpu.core_type<tc>, window_params = [{transform_indices = @transform_0, window_bounds = array<i64: 2, 8, 128>}, {transform_indices = @transform_1, window_bounds = array<i64: 2, 128, 128>}, {transform_indices = @transform_2, window_bounds = array<i64: 2, 1, 128>}, {transform_indices = @transform_3, window_bounds = array<i64: 2, 8, 128>}]} {
    %c0 = arith.constant 0 : index
    %c0_0 = arith.constant 0 : index
    %c0_1 = arith.constant 0 : index
    %0 = vector.load %arg3[%c0, %c0_0, %c0_1] : memref<2x8x128xbf16, #tpu.memory_space<vmem>>, vector<2x8x128xbf16>
    %c0_2 = arith.constant 0 : index
    %c0_3 = arith.constant 0 : index
    %c0_4 = arith.constant 0 : index
    %1 = vector.load %arg4[%c0_2, %c0_3, %c0_4] : memref<2x128x128xbf16, #tpu.memory_space<vmem>>, vector<2x128x128xbf16>
    %cst = arith.constant dense<0.000000e+00> : vector<2x8x128xf32>
    %2 = tpu.matmul %0, %1, %cst {dimension_numbers = #tpu.dot_dimension_numbers<[2], [1], [1], [2], [0, 0, 0, 1, 1, 2], [0], [0]>} : vector<2x8x128xbf16>, vector<2x128x128xbf16>, vector<2x8x128xf32> -> vector<2x8x128xf32>
    %c0_5 = arith.constant 0 : index
    %c0_6 = arith.constant 0 : index
    %c0_7 = arith.constant 0 : index
    %3 = vector.load %arg5[%c0_5, %c0_6, %c0_7] : memref<2x1x128xf32, #tpu.memory_space<vmem>>, vector<2x1x128xf32>
    %4 = vector.broadcast %3 : vector<2x1x128xf32> to vector<2x8x128xf32>
    %5 = arith.addf %2, %4 : vector<2x8x128xf32>
    %c0_8 = arith.constant 0 : index
    %c0_9 = arith.constant 0 : index
    %c0_10 = arith.constant 0 : index
    %6 = vector.load %arg6[%c0_8, %c0_9, %c0_10] : memref<2x8x128xf32, #tpu.memory_space<vmem>>, vector<2x8x128xf32>
    tpu.vector_store %arg6[%c0_8, %c0_9, %c0_10], %5 {strides = array<i32>} : memref<2x8x128xf32, #tpu.memory_space<vmem>>, vector<2x8x128xf32>,
    return
  }
  func.func @transform_0(%arg0: i32, %arg1: i32, %arg2: i32) -> (i32, i32, i32) {
    %c0_i32 = arith.constant 0 : i32
    %c0_i32_0 = arith.constant 0 : i32
    return %arg0, %arg2, %c0_i32 : i32, i32, i32
  }
  func.func @transform_1(%arg0: i32, %arg1: i32, %arg2: i32) -> (i32, i32, i32) {
    %c0_i32 = arith.constant 0 : i32
    %c0_i32_0 = arith.constant 0 : i32
    return %arg0, %c0_i32, %arg1 : i32, i32, i32
  }
  func.func @transform_2(%arg0: i32, %arg1: i32, %arg2: i32) -> (i32, i32, i32) {
    %c0_i32 = arith.constant 0 : i32
    %c0_i32_0 = arith.constant 0 : i32
    return %arg0, %c0_i32, %arg1 : i32, i32, i32
  }
  func.func @transform_3(%arg0: i32, %arg1: i32, %arg2: i32) -> (i32, i32, i32) {
    %c0_i32 = arith.constant 0 : i32
    return %arg0, %arg2, %arg1 : i32, i32, i32
  }
}

</mosaic_0001>

<llo_original>
// kernel: tpu_custom_call.1
$region0: #{tpu_custom_call.1}
  #allocation0 [shape = 'u32[]', space=smem, size = 0x4, offset = 0x4, fixed_abs, tag = 'smem constant byte address 0x4 - core index']
  #allocation1 [shape = 'u32[144,128]{1,0:T(1,128)}', space=vmem, size = 0x12000, scoped, tag = 'internal scratch']
  %s0 = inlined_call_operand.hbm [shape: bf16[4,8,128], index: 0, kind: input, shape index: {}]
  %s1 = inlined_call_operand.hbm [shape: bf16[4,128,128], index: 1, kind: input, shape index: {}]
  %s2 = inlined_call_operand.vmem [shape: f32[4,1,128], index: 2, kind: input, shape index: {}]
  %s3 = inlined_call_operand.hbm [shape: f32[4,8,128], index: 3, kind: output, shape index: {}]
  %s4 = sld [smem:[#allocation0]]
  $region53: #{tpu_custom_call.1} parent=0
    _
  %s6 = ssub.s32 1, %s4
  %s7 = scalar_select 0, %s6, %s4
  $region1: #{tpu_custom_call.1} parent=0
    #allocation2 [shape = 'u8[8192]{0}', space=vmem, size = 0x2000, scoped, tag = 'input window, operand 0']
    #allocation3 [shape = 's32[2]{0}', space=sflag, size = 0x8, scoped, tag = 'scoped memory for tpu_custom_call.1']
    #allocation4 [shape = 's32[2]{0}', space=sflag, size = 0x8, scoped, tag = 'scoped memory for tpu_custom_call.1']
    #allocation5 [shape = 'u8[131072]{0}', space=vmem, size = 0x20000, scoped, tag = 'input window, operand 1']
    #allocation6 [shape = 's32[2]{0}', space=sflag, size = 0x8, scoped, tag = 'scoped memory for tpu_custom_call.1']
    #allocation7 [shape = 'u8[16384]{0}', space=vmem, size = 0x4000, scoped, tag = 'output window, operand 0']
    %8 = vsyncpa [#allocation3], 0
    %s9 = scalar_lea.sflag [#allocation3], 1
    %10 = vsyncpa %s9, 0
    %11 = vsyncpa [#allocation6], 0
    %s12 = scalar_lea.sflag [#allocation6], 1
    %13 = vsyncpa %s12, 0
    %14 = vsyncpa [#allocation4], 0
    %s15 = scalar_lea.sflag [#allocation4], 1
    %16 = vsyncpa %s15, 0
    loop: start=0, step=1, limit=4
    $region2: #{tpu_custom_call.1} parent=1 // loop_pre_header
      _
    $region3: #{tpu_custom_call.1} parent=1 // loop_header
      %s18 = sphi 0, %s22
      %p19 = scmp.ge.s32.totalorder %s18, 4
      %s25 = sphi 0, %s44
      %s26 = sphi 0, %s40
      %s27 = sphi 0, %s36
      %s28 = sphi 0, %s25
      %s29 = sphi 0, %s26
      %s30 = sphi 0, %s27
      %s31 = sphi 0, %s28
      %s32 = sphi 0, %s29
      %s33 = sphi 0, %s30
      %s49 = sphi 0, %s51
      %s52 = sphi 0, %s49
      %s53 = sphi 0, %s52
      %s69 = sphi 0, %s53
      %s77 = sphi 0, %s79
      %s80 = sphi 0, %s77
      %s81 = sphi 0, %s80
      %s97 = sphi 0, %s81
      %s105 = sphi 0, %s107
      %s108 = sphi 0, %s105
      %s109 = sphi 0, %s108
      %s125 = sphi 0, %s109
      %s135 = sphi 0, %s137
      %s138 = sphi 0, %s135
      %s139 = sphi 0, %s138
      %s155 = sphi 0, %s139
    $region4: #{tpu_custom_call.1} parent=1 // loop_header_branch
      %21 = sbr.rel (%p19) target = $region8
    $region5: #{tpu_custom_call.1} parent=1 // loop_body
      %s23 = ssub.s32 %s18, 1
      %s24 = ssub.s32 %s18, 2
      %s34 = sadd.s32 1, %s27
      %p35 = scmp.ge.s32.totalorder %s34, 1
      %s36 = scalar_select %p35, 0, %s34
      %s37 = sadd.s32 1, %s26
      %s38 = scalar_select %p35, %s37, %s26
      %p39 = scmp.ge.s32.totalorder %s38, 1
      %s40 = scalar_select %p39, 0, %s38
      %s41 = sadd.s32 1, %s25
      %s42 = scalar_select %p39, %s41, %s25
      %p43 = scmp.ge.s32.totalorder %s42, 2
      %s44 = scalar_select %p43, 0, %s42
      %s45 = ssub.s32 %s25, %s44
      %s46 = ssub.s32 %s27, %s36
      %s47 = sor.u32 %s45, %s46
      %p48 = scmp.eq.s32.totalorder %s47, 0
      %s50 = sadd.s32 %s49, 1
      %s51 = scalar_select %p48, %s49, %s50
      %p54 = pneg %p48
      %p55 = scmp.eq.s32.totalorder %s18, 1
      %p56 = por %p54, %p55
      %p57 = scmp.ne.s32.totalorder %s49, %s52
      %p58 = scmp.eq.s32.totalorder %s18, 0
      %p59 = por %p57, %p58
      %p60 = scmp.ne.s32.totalorder %s49, %s52
      %p61 = scmp.eq.s32.totalorder %s23, 1
      %p62 = por %p60, %p61
      %p63 = scmp.ne.s32.totalorder %s52, %s53
      %p64 = scmp.eq.s32.totalorder %s23, 0
      %p65 = por %p63, %p64
      %p66 = scmp.ne.s32.totalorder %s52, %s53
      %p67 = scmp.eq.s32.totalorder %s24, 1
      %p68 = por %p66, %p67
      %p70 = scmp.ne.s32.totalorder %s53, %s69
      %p71 = scmp.eq.s32.totalorder %s24, 0
      %p72 = por %p70, %p71
      %s73 = ssub.s32 %s25, %s44
      %s74 = ssub.s32 %s26, %s40
      %s75 = sor.u32 %s73, %s74
      %p76 = scmp.eq.s32.totalorder %s75, 0
      %s78 = sadd.s32 %s77, 1
      %s79 = scalar_select %p76, %s77, %s78
      %p82 = pneg %p76
      %p83 = scmp.eq.s32.totalorder %s18, 1
      %p84 = por %p82, %p83
      %p85 = scmp.ne.s32.totalorder %s77, %s80
      %p86 = scmp.eq.s32.totalorder %s18, 0
      %p87 = por %p85, %p86
      %p88 = scmp.ne.s32.totalorder %s77, %s80
      %p89 = scmp.eq.s32.totalorder %s23, 1
      %p90 = por %p88, %p89
      %p91 = scmp.ne.s32.totalorder %s80, %s81
      %p92 = scmp.eq.s32.totalorder %s23, 0
      %p93 = por %p91, %p92
      %p94 = scmp.ne.s32.totalorder %s80, %s81
      %p95 = scmp.eq.s32.totalorder %s24, 1
      %p96 = por %p94, %p95
      %p98 = scmp.ne.s32.totalorder %s81, %s97
      %p99 = scmp.eq.s32.totalorder %s24, 0
      %p100 = por %p98, %p99
      %s101 = ssub.s32 %s25, %s44
      %s102 = ssub.s32 %s26, %s40
      %s103 = sor.u32 %s101, %s102
      %p104 = scmp.eq.s32.totalorder %s103, 0
      %s106 = sadd.s32 %s105, 1
      %s107 = scalar_select %p104, %s105, %s106
      %p110 = pneg %p104
      %p111 = scmp.eq.s32.totalorder %s18, 1
      %p112 = por %p110, %p111
      %p113 = scmp.ne.s32.totalorder %s105, %s108
      %p114 = scmp.eq.s32.totalorder %s18, 0
      %p115 = por %p113, %p114
      %p116 = scmp.ne.s32.totalorder %s105, %s108
      %p117 = scmp.eq.s32.totalorder %s23, 1
      %p118 = por %p116, %p117
      %p119 = scmp.ne.s32.totalorder %s108, %s109
      %p120 = scmp.eq.s32.totalorder %s23, 0
      %p121 = por %p119, %p120
      %p122 = scmp.ne.s32.totalorder %s108, %s109
      %p123 = scmp.eq.s32.totalorder %s24, 1
      %p124 = por %p122, %p123
      %p126 = scmp.ne.s32.totalorder %s109, %s125
      %p127 = scmp.eq.s32.totalorder %s24, 0
      %p128 = por %p126, %p127
      %s129 = ssub.s32 %s25, %s44
      %s130 = ssub.s32 %s27, %s36
      %s131 = sor.u32 %s129, %s130
      %s132 = ssub.s32 %s26, %s40
      %s133 = sor.u32 %s131, %s132
      %p134 = scmp.eq.s32.totalorder %s133, 0
      %s136 = sadd.s32 %s135, 1
      %s137 = scalar_select %p134, %s135, %s136
      %p140 = pneg %p134
      %p141 = scmp.eq.s32.totalorder %s18, 1
      %p142 = por %p140, %p141
      %p143 = scmp.ne.s32.totalorder %s135, %s138
      %p144 = scmp.eq.s32.totalorder %s18, 0
      %p145 = por %p143, %p144
      %p146 = scmp.ne.s32.totalorder %s135, %s138
      %p147 = scmp.eq.s32.totalorder %s23, 1
      %p148 = por %p146, %p147
      %p149 = scmp.ne.s32.totalorder %s138, %s139
      %p150 = scmp.eq.s32.totalorder %s23, 0
      %p151 = por %p149, %p150
      %p152 = scmp.ne.s32.totalorder %s138, %s139
      %p153 = scmp.eq.s32.totalorder %s24, 1
      %p154 = por %p152, %p153
      %p156 = scmp.ne.s32.totalorder %s139, %s155
      %p157 = scmp.eq.s32.totalorder %s24, 0
      %p158 = por %p156, %p157
      %p159 = scmp.le.s32.totalorder 1, %s18
      %p160 = scmp.lt.s32.totalorder %s18, 3
      %p161 = pnand %p159, %p160
      %p162 = pneg %p161
      // Predicated region
      $region9: #{tpu_custom_call.1} parent=5 // pred_check
        _
      $region10: #{tpu_custom_call.1} parent=5 // pred_check_branch
        %164 = sbr.rel (%p161) target = $region12
      $region11: #{tpu_custom_call.1} parent=5 // pred_region
        %s165 = ssub.s32 %s18, 1
      $region12: #{tpu_custom_call.1} parent=5 // pred_fallthru
        _
      %p166 = scmp.lt.s32.totalorder %s18, 2
      // Predicated region
      $region13: #{tpu_custom_call.1} parent=5 // pred_check
        %p167 = pneg %p166
      $region14: #{tpu_custom_call.1} parent=5 // pred_check_branch
        %169 = sbr.rel (%p167) target = $region16
      $region15: #{tpu_custom_call.1} parent=5 // pred_region
        // Predicated region
        $region17: #{tpu_custom_call.1} parent=15 // pred_check
          %p170 = pneg %p59
        $region18: #{tpu_custom_call.1} parent=15 // pred_check_branch
          %172 = sbr.rel (%p170) target = $region20
        $region19: #{tpu_custom_call.1} parent=15 // pred_region
          %s173 = sand.u32 %s49, 1
          %s174 = scalar_lea.sflag [#allocation3], %s173
          %s175 = sand.u32 %s49, 1
          %s176 = smul.addr %s175, 8
          %s177 = scalar_lea.vmem [#allocation2], %s176
          %s178 = smul.u32 2, %s25
          %s180 = ssub.s32 128, 128
          %181 = vsyncadd %s174, %s180
          %s182 = sadd.s32 %s27, %s178
          %s183 = smul.addr %s182, 64
          %s184 = scalar_lea.hbm %s0, %s183
          %s185 = sshll.u32 %s177, 4
          %s186 = int_to_ptr.vmem [resolvable:$true] %s185
          %191 = dma.hbm_to_vmem [thread:$0]  %s184, 128, %s186, %s174, 64, 64, 4
        $region20: #{tpu_custom_call.1} parent=15 // pred_fallthru
          _
        // Predicated region
        $region21: #{tpu_custom_call.1} parent=15 // pred_check
          %p192 = pneg %p87
        $region22: #{tpu_custom_call.1} parent=15 // pred_check_branch
          %194 = sbr.rel (%p192) target = $region24
        $region23: #{tpu_custom_call.1} parent=15 // pred_region
          %s195 = sand.u32 %s77, 1
          %s196 = scalar_lea.sflag [#allocation6], %s195
          %s197 = sand.u32 %s77, 1
          %s198 = smul.addr %s197, 128
          %s199 = scalar_lea.vmem [#allocation5], %s198
          %s200 = smul.u32 2, %s25
          %s202 = ssub.s32 2048, 2048
          %203 = vsyncadd %s196, %s202
          %s204 = smul.addr %s200, 16
          %s205 = sadd.s32 %s26, %s204
          %s206 = smul.addr %s205, 64
          %s207 = scalar_lea.hbm %s1, %s206
          %s208 = sshll.u32 %s199, 4
          %s209 = int_to_ptr.vmem [resolvable:$true] %s208
          %214 = dma.hbm_to_vmem [thread:$0]  %s207, 2048, %s209, %s196, 64, 64, 4
        $region24: #{tpu_custom_call.1} parent=15 // pred_fallthru
          _
        // Predicated region
        $region25: #{tpu_custom_call.1} parent=15 // pred_check
          %p215 = pneg %p115
        $region26: #{tpu_custom_call.1} parent=15 // pred_check_branch
          %217 = sbr.rel (%p215) target = $region28
        $region27: #{tpu_custom_call.1} parent=15 // pred_region
          %s218 = smul.u32 2, %s25
          %p219 = scmp.lt.s32.totalorder %s218, 3
          %s220 = scalar_select %p219, %s218, 3
          %p221 = scmp.lt.s32.totalorder %s26, 0
          %s222 = scalar_select %p221, %s26, 0
          %s223 = sadd.s32 %s222, %s220
          %s224 = scalar_lea.vmem %s2, %s223
          %s225 = smul.u32 2, %s25
        $region28: #{tpu_custom_call.1} parent=15 // pred_fallthru
          _
      $region16: #{tpu_custom_call.1} parent=5 // pred_fallthru
        _
      %p226 = scmp.le.s32.totalorder 1, %s18
      %p227 = scmp.lt.s32.totalorder %s18, 3
      %p228 = pnand %p226, %p227
      %p229 = pneg %p228
      // Predicated region
      $region29: #{tpu_custom_call.1} parent=5 // pred_check
        _
      $region30: #{tpu_custom_call.1} parent=5 // pred_check_branch
        %231 = sbr.rel (%p228) target = $region32
      $region31: #{tpu_custom_call.1} parent=5 // pred_region
        %s232 = ssub.s32 %s18, 1
        %s233 = sand.u32 %s52, 1
        %s234 = scalar_lea.sflag [#allocation3], %s233
        %s235 = sand.u32 %s52, 1
        %s236 = smul.addr %s235, 8
        %s237 = scalar_lea.vmem [#allocation2], %s236
        // Predicated region
        $region33: #{tpu_custom_call.1} parent=31 // pred_check
          %p238 = pneg %p65
        $region34: #{tpu_custom_call.1} parent=31 // pred_check_branch
          %240 = sbr.rel (%p238) target = $region36
        $region35: #{tpu_custom_call.1} parent=31 // pred_region
          %241 = dma.done %s234, 128
        $region36: #{tpu_custom_call.1} parent=31 // pred_fallthru
          _
        %s242 = sand.u32 %s80, 1
        %s243 = scalar_lea.sflag [#allocation6], %s242
        %s244 = sand.u32 %s80, 1
        %s245 = smul.addr %s244, 128
        %s246 = scalar_lea.vmem [#allocation5], %s245
        // Predicated region
        $region37: #{tpu_custom_call.1} parent=31 // pred_check
          %p247 = pneg %p93
        $region38: #{tpu_custom_call.1} parent=31 // pred_check_branch
          %249 = sbr.rel (%p247) target = $region40
        $region39: #{tpu_custom_call.1} parent=31 // pred_region
          %250 = dma.done %s243, 2048
        $region40: #{tpu_custom_call.1} parent=31 // pred_fallthru
          _
        %s251 = sand.u32 %s52, 1
        %s252 = scalar_lea.sflag [#allocation3], %s251
        %s253 = sand.u32 %s52, 1
        %s254 = smul.addr %s253, 8
        %s255 = scalar_lea.vmem [#allocation2], %s254
        %p256 = pneg %p65
        %p257 = pneg %p62
        %s258 = sand.u32 %s80, 1
        %s259 = scalar_lea.sflag [#allocation6], %s258
        %s260 = sand.u32 %s80, 1
        %s261 = smul.addr %s260, 128
        %s262 = scalar_lea.vmem [#allocation5], %s261
        %p263 = pneg %p93
        %p264 = pneg %p90
        %s265 = smul.u32 2, %s28
        %p266 = scmp.lt.s32.totalorder %s265, 3
        %s267 = scalar_select %p266, %s265, 3
        %p268 = scmp.lt.s32.totalorder %s29, 0
        %s269 = scalar_select %p268, %s29, 0
        %s270 = sadd.s32 %s269, %s267
        %s271 = scalar_lea.vmem %s2, %s270
        %p272 = pneg %p121
        %p273 = pneg %p118
        %p274 = pneg %p151
        %p275 = pneg %p148
        %s276 = sand.u32 %s138, 1
        %s277 = scalar_lea.sflag [#allocation4], %s276
        %s278 = sand.u32 %s138, 1
        %s279 = smul.addr %s278, 16
        %s280 = scalar_lea.vmem [#allocation7], %s279
        %s281 = smul.u32 2, %s28
        %s282 = smul.u32 2, %s28
        %s283 = smul.u32 2, %s28
        %p284 = scmp.lt.s32.totalorder %s283, 3
        %s285 = scalar_select %p284, %s283, 3
        %p286 = scmp.lt.s32.totalorder %s29, 0
        %s287 = scalar_select %p286, %s29, 0
        %s288 = sadd.s32 %s287, %s285
        %s289 = scalar_lea.vmem %s2, %s288
        %s290 = smul.u32 2, %s28
        %s291 = smul.u32 2, %s28
        %v293 = vld [vmem:[%s237] sm:$0xf]
        %v294 = vld [vmem:[%s237 + $0x4] sm:$0xf]
        %v295 = vld [vmem:[%s246] sm:$0xf]
        %v296 = vld [vmem:[%s246 + $0x4] sm:$0xf]
        %v297 = vld [vmem:[%s246 + $0x8] sm:$0xf]
        %v298 = vld [vmem:[%s246 + $0xc] sm:$0xf]
        %v299 = vld [vmem:[%s246 + $0x10] sm:$0xf]
        %v300 = vld [vmem:[%s246 + $0x14] sm:$0xf]
        %v301 = vld [vmem:[%s246 + $0x18] sm:$0xf]
        %v302 = vld [vmem:[%s246 + $0x1c] sm:$0xf]
        %v303 = vld [vmem:[%s246 + $0x20] sm:$0xf]
        %v304 = vld [vmem:[%s246 + $0x24] sm:$0xf]
        %v305 = vld [vmem:[%s246 + $0x28] sm:$0xf]
        %v306 = vld [vmem:[%s246 + $0x2c] sm:$0xf]
        %v307 = vld [vmem:[%s246 + $0x30] sm:$0xf]
        %v308 = vld [vmem:[%s246 + $0x34] sm:$0xf]
        %v309 = vld [vmem:[%s246 + $0x38] sm:$0xf]
        %v310 = vld [vmem:[%s246 + $0x3c] sm:$0xf]
        %v311 = vld [vmem:[%s246 + $0x40] sm:$0xf]
        %v312 = vld [vmem:[%s246 + $0x44] sm:$0xf]
        %v313 = vld [vmem:[%s246 + $0x48] sm:$0xf]
        %v314 = vld [vmem:[%s246 + $0x4c] sm:$0xf]
        %v315 = vld [vmem:[%s246 + $0x50] sm:$0xf]
        %v316 = vld [vmem:[%s246 + $0x54] sm:$0xf]
        %v317 = vld [vmem:[%s246 + $0x58] sm:$0xf]
        %v318 = vld [vmem:[%s246 + $0x5c] sm:$0xf]
        %v319 = vld [vmem:[%s246 + $0x60] sm:$0xf]
        %v320 = vld [vmem:[%s246 + $0x64] sm:$0xf]
        %v321 = vld [vmem:[%s246 + $0x68] sm:$0xf]
        %v322 = vld [vmem:[%s246 + $0x6c] sm:$0xf]
        %v323 = vld [vmem:[%s246 + $0x70] sm:$0xf]
        %v324 = vld [vmem:[%s246 + $0x74] sm:$0xf]
        %v325 = vld [vmem:[%s246 + $0x78] sm:$0xf]
        %v326 = vld [vmem:[%s246 + $0x7c] sm:$0xf]
        %v327 = vld [vmem:[%s289] sm:$0x1]
        %v328 = vld [vmem:[%s289 + $0x1] sm:$0x1]
        %v331 = vlaneseq
        %v332 = vshrl.u32 %v331, 7
        %v333 = vsub.s32 0, %v332
        %v334 = vrot.slane %v327, %v333
        %v335 = vlaneseq
        %v336 = vshrl.u32 %v335, 7
        %v337 = vsub.s32 0, %v336
        %v338 = vrot.slane %v328, %v337
        %v357 = vunpack.c.l.b16 %v295
        %v358 = vunpack.c.l.b16 %v296
        %v359 = vunpack.c.l.b16 %v297
        %v360 = vunpack.c.l.b16 %v298
        %v361 = vunpack.c.l.b16 %v299
        %v362 = vunpack.c.l.b16 %v300
        %v363 = vunpack.c.l.b16 %v301
        %v364 = vunpack.c.l.b16 %v302
        %v365 = vunpack.c.l.b16 %v303
        %v366 = vunpack.c.l.b16 %v304
        %v367 = vunpack.c.l.b16 %v305
        %v368 = vunpack.c.l.b16 %v306
        %v369 = vunpack.c.l.b16 %v307
        %v370 = vunpack.c.l.b16 %v308
        %v371 = vunpack.c.l.b16 %v309
        %v372 = vunpack.c.l.b16 %v310
        %v373 = vpack.c.b16 %v358, %v357
        %v374 = vpack.c.b16 %v360, %v359
        %v375 = vpack.c.b16 %v362, %v361
        %v376 = vpack.c.b16 %v364, %v363
        %v377 = vpack.c.b16 %v366, %v365
        %v378 = vpack.c.b16 %v368, %v367
        %v379 = vpack.c.b16 %v370, %v369
        %v380 = vpack.c.b16 %v372, %v371
        %389 = vmatprep.subr.bf16.mxu0 0
        %390 = vmatpush1.bf16.msra.mxu0 %v373
        %391 = vmatprep.subr.bf16.mxu0 0
        %392 = vmatpush1.bf16.msra.mxu0 %v374
        %393 = vmatprep.subr.bf16.mxu0 0
        %394 = vmatpush1.bf16.msra.mxu0 %v375
        %395 = vmatprep.subr.bf16.mxu0 0
        %396 = vmatpush1.bf16.msra.mxu0 %v376
        %397 = vmatprep.subr.bf16.mxu0 0
        %398 = vmatpush1.bf16.msra.mxu0 %v377
        %399 = vmatprep.subr.bf16.mxu0 0
        %400 = vmatpush1.bf16.msra.mxu0 %v378
        %401 = vmatprep.subr.bf16.mxu0 0
        %402 = vmatpush1.bf16.msra.mxu0 %v379
        %403 = vmatprep.subr.bf16.mxu0 0
        %404 = vmatpush1.bf16.msra.mxu0 %v380
        %405 = vmatprep.subr.bf16.mxu0 0
        %406 = vmatpush1.bf16.msra.mxu0 0
        %407 = vmatprep.subr.bf16.mxu0 0
        %408 = vmatpush1.bf16.msra.mxu0 0
        %409 = vmatprep.subr.bf16.mxu0 0
        %410 = vmatpush1.bf16.msra.mxu0 0
        %411 = vmatprep.subr.bf16.mxu0 0
        %412 = vmatpush1.bf16.msra.mxu0 0
        %413 = vmatprep.subr.bf16.mxu0 0
        %414 = vmatpush1.bf16.msra.mxu0 0
        %415 = vmatprep.subr.bf16.mxu0 0
        %416 = vmatpush1.bf16.msra.mxu0 0
        %417 = vmatprep.subr.bf16.mxu0 0
        %418 = vmatpush1.bf16.msra.mxu0 0
        %419 = vmatprep.subr.bf16.mxu0 0
        %420 = vmatpush1.bf16.msra.mxu0 0
        %421 = vmatprep.mubr.bf16.mxu0 0
        %422 = vmatmul.mubr.bf16.gmra.mrb[0].mxu0 %v293
        %v423 = vpop.f32.mrb[0].mxu0
        %v424 = vadd.f32 %v334, %v423
        %v425 = vpop.f32.mrb[0].mxu0
        %v426 = vpop.f32.mrb[0].mxu0
        %v427 = vpop.f32.mrb[0].mxu0
        %428 = vdwg.mxu0
        %v445 = vunpack.c.l.b16 %v311
        %v446 = vunpack.c.l.b16 %v312
        %v447 = vunpack.c.l.b16 %v313
        %v448 = vunpack.c.l.b16 %v314
        %v449 = vunpack.c.l.b16 %v315
        %v450 = vunpack.c.l.b16 %v316
        %v451 = vunpack.c.l.b16 %v317
        %v452 = vunpack.c.l.b16 %v318
        %v453 = vunpack.c.l.b16 %v319
        %v454 = vunpack.c.l.b16 %v320
        %v455 = vunpack.c.l.b16 %v321
        %v456 = vunpack.c.l.b16 %v322
        %v457 = vunpack.c.l.b16 %v323
        %v458 = vunpack.c.l.b16 %v324
        %v459 = vunpack.c.l.b16 %v325
        %v460 = vunpack.c.l.b16 %v326
        %v461 = vpack.c.b16 %v446, %v445
        %v462 = vpack.c.b16 %v448, %v447
        %v463 = vpack.c.b16 %v450, %v449
        %v464 = vpack.c.b16 %v452, %v451
        %v465 = vpack.c.b16 %v454, %v453
        %v466 = vpack.c.b16 %v456, %v455
        %v467 = vpack.c.b16 %v458, %v457
        %v468 = vpack.c.b16 %v460, %v459
        %477 = vmatprep.subr.bf16.mxu0 0
        %478 = vmatpush1.bf16.msra.mxu0 %v461
        %479 = vmatprep.subr.bf16.mxu0 0
        %480 = vmatpush1.bf16.msra.mxu0 %v462
        %481 = vmatprep.subr.bf16.mxu0 0
        %482 = vmatpush1.bf16.msra.mxu0 %v463
        %483 = vmatprep.subr.bf16.mxu0 0
        %484 = vmatpush1.bf16.msra.mxu0 %v464
        %485 = vmatprep.subr.bf16.mxu0 0
        %486 = vmatpush1.bf16.msra.mxu0 %v465
        %487 = vmatprep.subr.bf16.mxu0 0
        %488 = vmatpush1.bf16.msra.mxu0 %v466
        %489 = vmatprep.subr.bf16.mxu0 0
        %490 = vmatpush1.bf16.msra.mxu0 %v467
        %491 = vmatprep.subr.bf16.mxu0 0
        %492 = vmatpush1.bf16.msra.mxu0 %v468
        %493 = vmatprep.subr.bf16.mxu0 0
        %494 = vmatpush1.bf16.msra.mxu0 0
        %495 = vmatprep.subr.bf16.mxu0 0
        %496 = vmatpush1.bf16.msra.mxu0 0
        %497 = vmatprep.subr.bf16.mxu0 0
        %498 = vmatpush1.bf16.msra.mxu0 0
        %499 = vmatprep.subr.bf16.mxu0 0
        %500 = vmatpush1.bf16.msra.mxu0 0
        %501 = vmatprep.subr.bf16.mxu0 0
        %502 = vmatpush1.bf16.msra.mxu0 0
        %503 = vmatprep.subr.bf16.mxu0 0
        %504 = vmatpush1.bf16.msra.mxu0 0
        %505 = vmatprep.subr.bf16.mxu0 0
        %506 = vmatpush1.bf16.msra.mxu0 0
        %507 = vmatprep.subr.bf16.mxu0 0
        %508 = vmatpush1.bf16.msra.mxu0 0
        %509 = vmatprep.mubr.bf16.mxu0 0
        %510 = vmatmul.mubr.bf16.gmra.mrb[0].mxu0 %v294
        %v511 = vpop.f32.mrb[0].mxu0
        %v512 = vadd.f32 %v338, %v511
        %v513 = vpop.f32.mrb[0].mxu0
        %v514 = vpop.f32.mrb[0].mxu0
        %v515 = vpop.f32.mrb[0].mxu0
        %516 = vdwg.mxu0
        %517 = vst [vmem:[%s280] sm:$0xff] %v424
        %518 = vst [vmem:[%s280 + $0x8] sm:$0xff] %v512
        %s519 = sand.u32 %s138, 1
        %s520 = scalar_lea.sflag [#allocation4], %s519
        %s521 = sand.u32 %s138, 1
        %s522 = smul.addr %s521, 16
        %s523 = scalar_lea.vmem [#allocation7], %s522
        // Predicated region
        $region41: #{tpu_custom_call.1} parent=31 // pred_check
          %p524 = pneg %p148
        $region42: #{tpu_custom_call.1} parent=31 // pred_check_branch
          %526 = sbr.rel (%p524) target = $region44
        $region43: #{tpu_custom_call.1} parent=31 // pred_region
          %s527 = smul.u32 2, %s28
          %s529 = ssub.s32 256, 256
          %530 = vsyncadd %s520, %s529
          %s531 = sadd.s32 %s29, %s30
          %s532 = sadd.s32 %s531, %s527
          %s533 = smul.addr %s532, 128
          %s534 = scalar_lea.hbm %s3, %s533
          %s535 = sshll.u32 %s523, 4
          %s536 = int_to_ptr.vmem [resolvable:$true] %s535
          %541 = dma.vmem_to_hbm [thread:$0]  %s536, 256, %s534, %s520, 128, 128, 8
        $region44: #{tpu_custom_call.1} parent=31 // pred_fallthru
          _
      $region32: #{tpu_custom_call.1} parent=5 // pred_fallthru
        _
      %p542 = scmp.le.s32.totalorder 2, %s18
      // Predicated region
      $region45: #{tpu_custom_call.1} parent=5 // pred_check
        %p543 = pneg %p542
      $region46: #{tpu_custom_call.1} parent=5 // pred_check_branch
        %545 = sbr.rel (%p543) target = $region48
      $region47: #{tpu_custom_call.1} parent=5 // pred_region
        %s546 = ssub.s32 %s18, 2
        // Predicated region
        $region49: #{tpu_custom_call.1} parent=47 // pred_check
          %p547 = pneg %p154
        $region50: #{tpu_custom_call.1} parent=47 // pred_check_branch
          %549 = sbr.rel (%p547) target = $region52
        $region51: #{tpu_custom_call.1} parent=47 // pred_region
          %s550 = sand.u32 %s139, 1
          %s551 = scalar_lea.sflag [#allocation4], %s550
          %s552 = sand.u32 %s139, 1
          %s553 = smul.addr %s552, 16
          %s554 = scalar_lea.vmem [#allocation7], %s553
          %555 = dma.done %s551, 256
        $region52: #{tpu_custom_call.1} parent=47 // pred_fallthru
          _
      $region48: #{tpu_custom_call.1} parent=5 // pred_fallthru
        _
    $region6: #{tpu_custom_call.1} parent=1 // loop_footer
      %s22 = sadd.s32 1, %s18
    $region7: #{tpu_custom_call.1} parent=1 // loop_footer_branch
      %17 = sbr.rel target = $region3
    $region8: #{tpu_custom_call.1} parent=1 // loop_exit
      _
    %556 = vsyncpa [#allocation3], 1
    %s557 = scalar_lea.sflag [#allocation3], 1
    %558 = vsyncpa %s557, 1
    %559 = vsyncpa [#allocation6], 1
    %s560 = scalar_lea.sflag [#allocation6], 1
    %561 = vsyncpa %s560, 1
    %562 = vsyncpa [#allocation4], 1
    %s563 = scalar_lea.sflag [#allocation4], 1
    %564 = vsyncpa %s563, 1

</llo_original>
